<compile_context>
chip_gen: v5e
topology: v5e:2x2
jax: 0.10.0
libtpu: 0.0.40
codegen_flags: <defaults>
</compile_context>

<pallas_src>
import functools

import jax
import jax.numpy as jnp
from jax.experimental import pallas as pl
from jax.experimental.pallas import tpu as pltpu


def value_net_kernel(x_ref, w1_ref, b1_ref, w2_ref, b2_ref, w3_ref, b3_ref, o_ref):
    # fc1 -> relu   (bf16 operands, f32 accumulation on the MXU)
    h1 = jnp.dot(x_ref[...], w1_ref[...], preferred_element_type=jnp.float32)
    h1 = jnp.maximum(h1 + b1_ref[...], 0.0)

    # fc2 -> relu   (dropout = identity at inference)
    h2 = jnp.dot(h1.astype(w2_ref.dtype), w2_ref[...],
                 preferred_element_type=jnp.float32)
    h2 = jnp.maximum(h2 + b2_ref[...], 0.0)
    # TODO(synk): training-mode dropout (p=0.2) not implemented; if needed, use
    # pltpu.prng_seed + pltpu.prng_random_bits + jnp.where with a prefetched seed.

    # fc3 (256 -> 1) as a VPU multiply + lane reduction; avoids an N=1 MXU matmul.
    out = jnp.sum(h2 * w3_ref[...], axis=-1, keepdims=True) + b3_ref[...]
    o_ref[...] = out


def _round_up(n, m):
    return ((n + m - 1) // m) * m


@functools.partial(jax.jit, static_argnames=("batch_tile",))
def value_network_forward(x, params, *, batch_tile=128):
    """x: (B, state_size) float32. Returns (B, 1) float32."""
    w1, b1, w2, b2, w3, b3 = params
    B, S = x.shape
    H = w1.shape[1]

    # Batch tile: multiple of 8 sublanes, capped at `batch_tile` rows per step.
    TB = min(batch_tile, _round_up(B, 8))
    Bp = _round_up(B, TB)
    if Bp != B:
        x = jnp.pad(x, ((0, Bp - B), (0, 0)))

    # bf16 compute dtypes for the MXU; biases + fc3 head stay f32.
    xb = x.astype(jnp.bfloat16)
    w1b = w1.astype(jnp.bfloat16)
    w2b = w2.astype(jnp.bfloat16)
    w3_row = w3.reshape(1, H).astype(jnp.float32)  # (1, H) row for the VPU head

    grid = (Bp // TB,)
    resident = lambda shape: pl.BlockSpec(shape, lambda i: (0, 0))  # weights stay in VMEM

    out = pl.pallas_call(
        value_net_kernel,
        out_shape=jax.ShapeDtypeStruct((Bp, 1), jnp.float32),
        grid=grid,
        in_specs=[
            pl.BlockSpec((TB, S), lambda i: (i, 0)),   # x tile (double-buffered)
            resident((S, H)),                          # w1
            resident((1, H)),                          # b1
            resident((H, H)),                          # w2
            resident((1, H)),                          # b2
            resident((1, H)),                          # w3 as a row
            resident((1, 1)),                          # b3
        ],
        out_specs=pl.BlockSpec((TB, 1), lambda i: (i, 0)),
        compiler_params=pltpu.CompilerParams(
            dimension_semantics=("parallel",),         # shard batch across TCs on v7x
        ),
    )(xb, w1b, b1, w2b, b2, w3_row, b3)

    return out[:B]


def init_params(key, state_size, hidden=256):
    """Deterministic synthetic init (not a checkpoint). Weights stored as (in, out)."""
    k1, k2, k3, k4, k5, k6 = jax.random.split(key, 6)
    s1 = 1.0 / jnp.sqrt(state_size)
    s2 = 1.0 / jnp.sqrt(hidden)
    w1 = jax.random.uniform(k1, (state_size, hidden), jnp.float32, -s1, s1)
    b1 = jax.random.uniform(k2, (1, hidden), jnp.float32, -s1, s1)
    w2 = jax.random.uniform(k3, (hidden, hidden), jnp.float32, -s2, s2)
    b2 = jax.random.uniform(k4, (1, hidden), jnp.float32, -s2, s2)
    w3 = jax.random.uniform(k5, (hidden, 1), jnp.float32, -s2, s2)
    b3 = jax.random.uniform(k6, (1, 1), jnp.float32, -s2, s2)
    return (w1, b1, w2, b2, w3, b3)


def _reference(x, params):
    w1, b1, w2, b2, w3, b3 = params
    h = jnp.maximum(x @ w1 + b1, 0.0)
    h = jnp.maximum(h @ w2 + b2, 0.0)
    return h @ w3 + b3


if __name__ == "__main__":
    key = jax.random.PRNGKey(0)
    kx, kp, kx2 = jax.random.split(key, 3)

    state_size = 32  # small, consistent with an RL state vector
    params = init_params(kp, state_size)

    # Small-batch case (single grid step).
    batch = 8
    x = jax.random.normal(kx, (batch, state_size), dtype=jnp.float32)
    out = jax.block_until_ready(value_network_forward(x, params))
    ref = _reference(x, params)
    assert out.shape == (batch, 1)
    # bf16 matmuls -> relaxed tolerance vs. the f32 reference.
    assert jnp.allclose(out, ref, atol=5e-2, rtol=5e-2), (
        float(jnp.max(jnp.abs(out - ref))))

    # Larger, non-multiple batch to exercise the batch grid + padding path.
    batch2 = 260
    x2 = jax.random.normal(kx2, (batch2, state_size), dtype=jnp.float32)
    out2 = jax.block_until_ready(value_network_forward(x2, params))
    ref2 = _reference(x2, params)
    assert out2.shape == (batch2, 1)
    assert jnp.allclose(out2, ref2, atol=5e-2, rtol=5e-2), (
        float(jnp.max(jnp.abs(out2 - ref2))))

    print("KERNEL_OK")
</pallas_src>

<mosaic_0001>
module attributes {stable_mosaic.version = 11 : i64} {
  func.func @value_net_kernel(%arg0: i32, %arg1: memref<8x32xbf16, #tpu.memory_space<vmem>>, %arg2: memref<32x256xbf16, #tpu.memory_space<vmem>>, %arg3: memref<1x256xf32, #tpu.memory_space<vmem>>, %arg4: memref<256x256xbf16, #tpu.memory_space<vmem>>, %arg5: memref<1x256xf32, #tpu.memory_space<vmem>>, %arg6: memref<1x256xf32, #tpu.memory_space<vmem>>, %arg7: memref<1x1xf32, #tpu.memory_space<vmem>>, %arg8: memref<8x1xf32, #tpu.memory_space<vmem>>) attributes {dimension_semantics = [#tpu.dimension_semantics<parallel>], iteration_bounds = array<i64: 1>, scalar_prefetch = 0 : i64, scratch_operands = 0 : i64, tpu.core_type = #tpu.core_type<tc>, window_params = [{transform_indices = @transform_0, window_bounds = array<i64: 8, 32>}, {pipeline_mode = #tpu.pipeline_mode<synchronous>, transform_indices = @transform_1, window_bounds = array<i64: 32, 256>}, {pipeline_mode = #tpu.pipeline_mode<synchronous>, transform_indices = @transform_2, window_bounds = array<i64: 1, 256>}, {pipeline_mode = #tpu.pipeline_mode<synchronous>, transform_indices = @transform_3, window_bounds = array<i64: 256, 256>}, {pipeline_mode = #tpu.pipeline_mode<synchronous>, transform_indices = @transform_4, window_bounds = array<i64: 1, 256>}, {pipeline_mode = #tpu.pipeline_mode<synchronous>, transform_indices = @transform_5, window_bounds = array<i64: 1, 256>}, {pipeline_mode = #tpu.pipeline_mode<synchronous>, transform_indices = @transform_6, window_bounds = array<i64: 1, 1>}, {transform_indices = @transform_7, window_bounds = array<i64: 8, 1>}]} {
    %c0 = arith.constant 0 : index
    %c0_0 = arith.constant 0 : index
    %0 = vector.load %arg1[%c0, %c0_0] : memref<8x32xbf16, #tpu.memory_space<vmem>>, vector<8x32xbf16>
    %c0_1 = arith.constant 0 : index
    %c0_2 = arith.constant 0 : index
    %1 = vector.load %arg2[%c0_1, %c0_2] : memref<32x256xbf16, #tpu.memory_space<vmem>>, vector<32x256xbf16>
    %cst = arith.constant dense<0.000000e+00> : vector<8x256xf32>
    %2 = tpu.matmul %0, %1, %cst {dimension_numbers = #tpu.dot_dimension_numbers<[1], [0], [0], [1], [0, 0, 1, 1], [], []>} : vector<8x32xbf16>, vector<32x256xbf16>, vector<8x256xf32> -> vector<8x256xf32>
    %c0_3 = arith.constant 0 : index
    %c0_4 = arith.constant 0 : index
    %3 = vector.load %arg3[%c0_3, %c0_4] : memref<1x256xf32, #tpu.memory_space<vmem>>, vector<1x256xf32>
    %4 = vector.broadcast %3 : vector<1x256xf32> to vector<8x256xf32>
    %5 = arith.addf %2, %4 : vector<8x256xf32>
    %cst_5 = arith.constant 0.000000e+00 : f32
    %6 = vector.broadcast %cst_5 : f32 to vector<8x256xf32>
    %7 = arith.maximumf %5, %6 : vector<8x256xf32>
    %8 = arith.truncf %7 : vector<8x256xf32> to vector<8x256xbf16>
    %c0_6 = arith.constant 0 : index
    %c0_7 = arith.constant 0 : index
    %9 = vector.load %arg4[%c0_6, %c0_7] : memref<256x256xbf16, #tpu.memory_space<vmem>>, vector<256x256xbf16>
    %cst_8 = arith.constant dense<0.000000e+00> : vector<8x256xf32>
    %10 = tpu.matmul %8, %9, %cst_8 {dimension_numbers = #tpu.dot_dimension_numbers<[1], [0], [0], [1], [0, 0, 1, 1], [], []>} : vector<8x256xbf16>, vector<256x256xbf16>, vector<8x256xf32> -> vector<8x256xf32>
    %c0_9 = arith.constant 0 : index
    %c0_10 = arith.constant 0 : index
    %11 = vector.load %arg5[%c0_9, %c0_10] : memref<1x256xf32, #tpu.memory_space<vmem>>, vector<1x256xf32>
    %12 = vector.broadcast %11 : vector<1x256xf32> to vector<8x256xf32>
    %13 = arith.addf %10, %12 : vector<8x256xf32>
    %cst_11 = arith.constant 0.000000e+00 : f32
    %14 = vector.broadcast %cst_11 : f32 to vector<8x256xf32>
    %15 = arith.maximumf %13, %14 : vector<8x256xf32>
    %c0_12 = arith.constant 0 : index
    %c0_13 = arith.constant 0 : index
    %16 = vector.load %arg6[%c0_12, %c0_13] : memref<1x256xf32, #tpu.memory_space<vmem>>, vector<1x256xf32>
    %17 = vector.broadcast %16 : vector<1x256xf32> to vector<8x256xf32>
    %18 = arith.mulf %15, %17 : vector<8x256xf32>
    %cst_14 = arith.constant dense<0.000000e+00> : vector<8xf32>
    %19 = vector.multi_reduction <add>, %18, %cst_14 [1] : vector<8x256xf32> to vector<8xf32>
    %20 = vector.shape_cast %19 : vector<8xf32> to vector<8x1xf32>
    %c0_15 = arith.constant 0 : index
    %c0_16 = arith.constant 0 : index
    %21 = vector.load %arg7[%c0_15, %c0_16] : memref<1x1xf32, #tpu.memory_space<vmem>>, vector<1x1xf32>
    %22 = vector.broadcast %21 : vector<1x1xf32> to vector<8x1xf32>
    %23 = arith.addf %20, %22 : vector<8x1xf32>
    %c0_17 = arith.constant 0 : index
    %c0_18 = arith.constant 0 : index
    %24 = vector.load %arg8[%c0_17, %c0_18] : memref<8x1xf32, #tpu.memory_space<vmem>>, vector<8x1xf32>
    tpu.vector_store %arg8[%c0_17, %c0_18], %23 {strides = array<i32>} : memref<8x1xf32, #tpu.memory_space<vmem>>, vector<8x1xf32>,
    return
  }
  func.func @transform_0(%arg0: i32) -> (i32, i32) {
    %c0_i32 = arith.constant 0 : i32
    %c0_i32_0 = arith.constant 0 : i32
    return %arg0, %c0_i32 : i32, i32
  }
  func.func @transform_1(%arg0: i32) -> (i32, i32) {
    %c0_i32 = arith.constant 0 : i32
    %c0_i32_0 = arith.constant 0 : i32
    %c0_i32_1 = arith.constant 0 : i32
    return %c0_i32, %c0_i32_0 : i32, i32
  }
  func.func @transform_2(%arg0: i32) -> (i32, i32) {
    %c0_i32 = arith.constant 0 : i32
    %c0_i32_0 = arith.constant 0 : i32
    %c0_i32_1 = arith.constant 0 : i32
    return %c0_i32, %c0_i32_0 : i32, i32
  }
  func.func @transform_3(%arg0: i32) -> (i32, i32) {
    %c0_i32 = arith.constant 0 : i32
    %c0_i32_0 = arith.constant 0 : i32
    %c0_i32_1 = arith.constant 0 : i32
    return %c0_i32, %c0_i32_0 : i32, i32
  }
  func.func @transform_4(%arg0: i32) -> (i32, i32) {
    %c0_i32 = arith.constant 0 : i32
    %c0_i32_0 = arith.constant 0 : i32
    %c0_i32_1 = arith.constant 0 : i32
    return %c0_i32, %c0_i32_0 : i32, i32
  }
  func.func @transform_5(%arg0: i32) -> (i32, i32) {
    %c0_i32 = arith.constant 0 : i32
    %c0_i32_0 = arith.constant 0 : i32
    %c0_i32_1 = arith.constant 0 : i32
    return %c0_i32, %c0_i32_0 : i32, i32
  }
  func.func @transform_6(%arg0: i32) -> (i32, i32) {
    %c0_i32 = arith.constant 0 : i32
    %c0_i32_0 = arith.constant 0 : i32
    %c0_i32_1 = arith.constant 0 : i32
    return %c0_i32, %c0_i32_0 : i32, i32
  }
  func.func @transform_7(%arg0: i32) -> (i32, i32) {
    %c0_i32 = arith.constant 0 : i32
    %c0_i32_0 = arith.constant 0 : i32
    return %arg0, %c0_i32 : i32, i32
  }
}

</mosaic_0001>

<llo_original>
// kernel: value_network_forward.1
$region0: #{value_network_forward.1}
  #allocation0 [shape = 'u32[]', space=smem, size = 0x4, offset = 0x4, fixed_abs, tag = 'smem constant byte address 0x4 - core index']
  #allocation1 [shape = 'u32[72,128]{1,0:T(1,128)}', space=vmem, size = 0x9000, scoped, tag = 'internal scratch']
  #allocation2 [shape = 'f32[1,1]{1,0:T(1,128)S(1)}', space=vmem, size = 0x200, scoped, tag = 'scoped memory for value_network_forward.1']
  %s0 = inlined_call_operand.vmem [shape: bf16[8,32], index: 0, kind: input, shape index: {}]
  %s1 = inlined_call_operand.vmem [shape: bf16[32,256], index: 1, kind: input, shape index: {}]
  %s2 = inlined_call_operand.vmem [shape: f32[1,256], index: 2, kind: input, shape index: {}]
  %s3 = inlined_call_operand.vmem [shape: bf16[256,256], index: 3, kind: input, shape index: {}]
  %s4 = inlined_call_operand.vmem [shape: f32[1,256], index: 4, kind: input, shape index: {}]
  %s5 = inlined_call_operand.vmem [shape: f32[1,256], index: 5, kind: input, shape index: {}]
  %s6 = inlined_call_operand.<no memory space> [shape: f32[1,1], index: 6, kind: input, shape index: {}]
  %s7 = inlined_call_operand.vmem [shape: f32[8,1], index: 7, kind: output, shape index: {}]
  %s8 = sld [smem:[#allocation0]]
  $region38: #{value_network_forward.1} parent=0
    _
  %s10 = ssub.s32 1, %s8
  %s11 = scalar_select 0, %s10, %s8
  %v12 = vstv %s6
  %13 = vst [vmem:[#allocation2] sm:$0x1] %v12
  // Predicated region
  $region2: #{value_network_forward.1} parent=0 // pred_check
    _
  $region3: #{value_network_forward.1} parent=0 // pred_check_branch
    %15 = sbr.rel (0) target = $region5
  $region4: #{value_network_forward.1} parent=0 // pred_region
    _
  $region5: #{value_network_forward.1} parent=0 // pred_fallthru
    _
  // Predicated region
  $region6: #{value_network_forward.1} parent=0 // pred_check
    _
  $region7: #{value_network_forward.1} parent=0 // pred_check_branch
    %17 = sbr.rel (0) target = $region9
  $region8: #{value_network_forward.1} parent=0 // pred_region
    _
  $region9: #{value_network_forward.1} parent=0 // pred_fallthru
    _
  // Predicated region
  $region10: #{value_network_forward.1} parent=0 // pred_check
    _
  $region11: #{value_network_forward.1} parent=0 // pred_check_branch
    %19 = sbr.rel (0) target = $region13
  $region12: #{value_network_forward.1} parent=0 // pred_region
    _
  $region13: #{value_network_forward.1} parent=0 // pred_fallthru
    _
  // Predicated region
  $region14: #{value_network_forward.1} parent=0 // pred_check
    _
  $region15: #{value_network_forward.1} parent=0 // pred_check_branch
    %21 = sbr.rel (0) target = $region17
  $region16: #{value_network_forward.1} parent=0 // pred_region
    _
  $region17: #{value_network_forward.1} parent=0 // pred_fallthru
    _
  // Predicated region
  $region18: #{value_network_forward.1} parent=0 // pred_check
    _
  $region19: #{value_network_forward.1} parent=0 // pred_check_branch
    %23 = sbr.rel (0) target = $region21
  $region20: #{value_network_forward.1} parent=0 // pred_region
    _
  $region21: #{value_network_forward.1} parent=0 // pred_fallthru
    _
  // Predicated region
  $region22: #{value_network_forward.1} parent=0 // pred_check
    _
  $region23: #{value_network_forward.1} parent=0 // pred_check_branch
    %25 = sbr.rel (0) target = $region25
  $region24: #{value_network_forward.1} parent=0 // pred_region
    _
  $region25: #{value_network_forward.1} parent=0 // pred_fallthru
    _
  // Predicated region
  $region26: #{value_network_forward.1} parent=0 // pred_check
    _
  $region27: #{value_network_forward.1} parent=0 // pred_check_branch
    %27 = sbr.rel (0) target = $region29
  $region28: #{value_network_forward.1} parent=0 // pred_region
    _
  $region29: #{value_network_forward.1} parent=0 // pred_fallthru
    _
  %v29 = vld [vmem:[%s0] sm:$0xf]
  %v30 = vld [vmem:[%s1] sm:$0xff]
  %v31 = vld [vmem:[%s1 + $0x8] sm:$0xff]
  %v32 = vld [vmem:[%s1 + $0x10] sm:$0xff]
  %v33 = vld [vmem:[%s1 + $0x18] sm:$0xff]
  %v34 = vld [vmem:[%s2] sm:$0x3]
  %v36 = vperm.slane %v34, 0
  %v37 = vperm.slane %v34, 1
  %v44 = vunpack.c.l.b16 %v30
  %v45 = vunpack.c.h.b16 %v30
  %v46 = vunpack.c.l.b16 %v31
  %v47 = vunpack.c.h.b16 %v31
  %v48 = vunpack.c.l.b16 %v32
  %v49 = vunpack.c.h.b16 %v32
  %v50 = vunpack.c.l.b16 %v33
  %v51 = vunpack.c.h.b16 %v33
  %v52 = vpack.c.b16 %v46, %v44
  %v53 = vpack.c.b16 %v47, %v45
  %v54 = vpack.c.b16 %v50, %v48
  %v55 = vpack.c.b16 %v51, %v49
  %vm60 = vcmask 261120
  %v62 = vsel %vm60, %v29, 0
  %64 = vmatpush.bf16.msra.mxu0 0
  %65 = vmatpush.bf16.msra.mxu0 0
  %66 = vmatpush.bf16.msra.mxu0 0
  %67 = vmatpush.bf16.msra.mxu0 0
  %68 = vmatpush.bf16.msra.mxu0 0
  %69 = vmatpush.bf16.msra.mxu0 0
  %70 = vmatpush.bf16.msra.mxu0 %v54
  %71 = vmatpush.bf16.msra.mxu0 %v52
  %72 = vmatmul.bf16.gmra.mxu0 %v62
  %v73 = vpop.f32.mrf.mxu0
  %v74 = vadd.f32 %v36, %v73
  %v75 = vpop.f32.mrf.mxu0
  %76 = vdwg.mxu0
  %77 = vmatpush.bf16.msra.mxu0 0
  %78 = vmatpush.bf16.msra.mxu0 0
  %79 = vmatpush.bf16.msra.mxu0 0
  %80 = vmatpush.bf16.msra.mxu0 0
  %81 = vmatpush.bf16.msra.mxu0 0
  %82 = vmatpush.bf16.msra.mxu0 0
  %83 = vmatpush.bf16.msra.mxu0 %v55
  %84 = vmatpush.bf16.msra.mxu0 %v53
  %85 = vmatmul.bf16.gmra.mxu0 %v62
  %v86 = vpop.f32.mrf.mxu0
  %v87 = vadd.f32 %v37, %v86
  %v88 = vpop.f32.mrf.mxu0
  %89 = vdwg.mxu0
  %v90 = vmax.f32 %v74, 0.0
  %v91 = vmax.f32 %v87, 0.0
  %v92 = vpack.c.bf16 %v90, %v90
  %v93 = vpack.c.bf16 %v91, %v91
  %v94 = vld [vmem:[%s3] sm:$0xff]
  %v95 = vld [vmem:[%s3 + $0x8] sm:$0xff]
  %v96 = vld [vmem:[%s3 + $0x10] sm:$0xff]
  %v97 = vld [vmem:[%s3 + $0x18] sm:$0xff]
  %v98 = vld [vmem:[%s3 + $0x20] sm:$0xff]
  %v99 = vld [vmem:[%s3 + $0x28] sm:$0xff]
  %v100 = vld [vmem:[%s3 + $0x30] sm:$0xff]
  %v101 = vld [vmem:[%s3 + $0x38] sm:$0xff]
  %v102 = vld [vmem:[%s3 + $0x40] sm:$0xff]
  %v103 = vld [vmem:[%s3 + $0x48] sm:$0xff]
  %v104 = vld [vmem:[%s3 + $0x50] sm:$0xff]
  %v105 = vld [vmem:[%s3 + $0x58] sm:$0xff]
  %v106 = vld [vmem:[%s3 + $0x60] sm:$0xff]
  %v107 = vld [vmem:[%s3 + $0x68] sm:$0xff]
  %v108 = vld [vmem:[%s3 + $0x70] sm:$0xff]
  %v109 = vld [vmem:[%s3 + $0x78] sm:$0xff]
  %v110 = vld [vmem:[%s3 + $0x80] sm:$0xff]
  %v111 = vld [vmem:[%s3 + $0x88] sm:$0xff]
  %v112 = vld [vmem:[%s3 + $0x90] sm:$0xff]
  %v113 = vld [vmem:[%s3 + $0x98] sm:$0xff]
  %v114 = vld [vmem:[%s3 + $0xa0] sm:$0xff]
  %v115 = vld [vmem:[%s3 + $0xa8] sm:$0xff]
  %v116 = vld [vmem:[%s3 + $0xb0] sm:$0xff]
  %v117 = vld [vmem:[%s3 + $0xb8] sm:$0xff]
  %v118 = vld [vmem:[%s3 + $0xc0] sm:$0xff]
  %v119 = vld [vmem:[%s3 + $0xc8] sm:$0xff]
  %v120 = vld [vmem:[%s3 + $0xd0] sm:$0xff]
  %v121 = vld [vmem:[%s3 + $0xd8] sm:$0xff]
  %v122 = vld [vmem:[%s3 + $0xe0] sm:$0xff]
  %v123 = vld [vmem:[%s3 + $0xe8] sm:$0xff]
  %v124 = vld [vmem:[%s3 + $0xf0] sm:$0xff]
  %v125 = vld [vmem:[%s3 + $0xf8] sm:$0xff]
  %v126 = vld [vmem:[%s4] sm:$0x3]
  %v128 = vperm.slane %v126, 0
  %v129 = vperm.slane %v126, 1
  %v164 = vunpack.c.l.b16 %v94
  %v165 = vunpack.c.h.b16 %v94
  %v166 = vunpack.c.l.b16 %v95
  %v167 = vunpack.c.h.b16 %v95
  %v168 = vunpack.c.l.b16 %v96
  %v169 = vunpack.c.h.b16 %v96
  %v170 = vunpack.c.l.b16 %v97
  %v171 = vunpack.c.h.b16 %v97
  %v172 = vunpack.c.l.b16 %v98
  %v173 = vunpack.c.h.b16 %v98
  %v174 = vunpack.c.l.b16 %v99
  %v175 = vunpack.c.h.b16 %v99
  %v176 = vunpack.c.l.b16 %v100
  %v177 = vunpack.c.h.b16 %v100
  %v178 = vunpack.c.l.b16 %v101
  %v179 = vunpack.c.h.b16 %v101
  %v180 = vunpack.c.l.b16 %v102
  %v181 = vunpack.c.h.b16 %v102
  %v182 = vunpack.c.l.b16 %v103
  %v183 = vunpack.c.h.b16 %v103
  %v184 = vunpack.c.l.b16 %v104
  %v185 = vunpack.c.h.b16 %v104
  %v186 = vunpack.c.l.b16 %v105
  %v187 = vunpack.c.h.b16 %v105
  %v188 = vunpack.c.l.b16 %v106
  %v189 = vunpack.c.h.b16 %v106
  %v190 = vunpack.c.l.b16 %v107
  %v191 = vunpack.c.h.b16 %v107
  %v192 = vunpack.c.l.b16 %v108
  %v193 = vunpack.c.h.b16 %v108
  %v194 = vunpack.c.l.b16 %v109
  %v195 = vunpack.c.h.b16 %v109
  %v196 = vunpack.c.l.b16 %v110
  %v197 = vunpack.c.h.b16 %v110
  %v198 = vunpack.c.l.b16 %v111
  %v199 = vunpack.c.h.b16 %v111
  %v200 = vunpack.c.l.b16 %v112
  %v201 = vunpack.c.h.b16 %v112
  %v202 = vunpack.c.l.b16 %v113
  %v203 = vunpack.c.h.b16 %v113
  %v204 = vunpack.c.l.b16 %v114
  %v205 = vunpack.c.h.b16 %v114
  %v206 = vunpack.c.l.b16 %v115
  %v207 = vunpack.c.h.b16 %v115
  %v208 = vunpack.c.l.b16 %v116
  %v209 = vunpack.c.h.b16 %v116
  %v210 = vunpack.c.l.b16 %v117
  %v211 = vunpack.c.h.b16 %v117
  %v212 = vunpack.c.l.b16 %v118
  %v213 = vunpack.c.h.b16 %v118
  %v214 = vunpack.c.l.b16 %v119
  %v215 = vunpack.c.h.b16 %v119
  %v216 = vunpack.c.l.b16 %v120
  %v217 = vunpack.c.h.b16 %v120
  %v218 = vunpack.c.l.b16 %v121
  %v219 = vunpack.c.h.b16 %v121
  %v220 = vunpack.c.l.b16 %v122
  %v221 = vunpack.c.h.b16 %v122
  %v222 = vunpack.c.l.b16 %v123
  %v223 = vunpack.c.h.b16 %v123
  %v224 = vunpack.c.l.b16 %v124
  %v225 = vunpack.c.h.b16 %v124
  %v226 = vunpack.c.l.b16 %v125
  %v227 = vunpack.c.h.b16 %v125
  %v228 = vpack.c.b16 %v166, %v164
  %v229 = vpack.c.b16 %v167, %v165
  %v230 = vpack.c.b16 %v170, %v168
  %v231 = vpack.c.b16 %v171, %v169
  %v232 = vpack.c.b16 %v174, %v172
  %v233 = vpack.c.b16 %v175, %v173
  %v234 = vpack.c.b16 %v178, %v176
  %v235 = vpack.c.b16 %v179, %v177
  %v236 = vpack.c.b16 %v182, %v180
  %v237 = vpack.c.b16 %v183, %v181
  %v238 = vpack.c.b16 %v186, %v184
  %v239 = vpack.c.b16 %v187, %v185
  %v240 = vpack.c.b16 %v190, %v188
  %v241 = vpack.c.b16 %v191, %v189
  %v242 = vpack.c.b16 %v194, %v192
  %v243 = vpack.c.b16 %v195, %v193
  %v244 = vpack.c.b16 %v198, %v196
  %v245 = vpack.c.b16 %v199, %v197
  %v246 = vpack.c.b16 %v202, %v200
  %v247 = vpack.c.b16 %v203, %v201
  %v248 = vpack.c.b16 %v206, %v204
  %v249 = vpack.c.b16 %v207, %v205
  %v250 = vpack.c.b16 %v210, %v208
  %v251 = vpack.c.b16 %v211, %v209
  %v252 = vpack.c.b16 %v214, %v212
  %v253 = vpack.c.b16 %v215, %v213
  %v254 = vpack.c.b16 %v218, %v216
  %v255 = vpack.c.b16 %v219, %v217
  %v256 = vpack.c.b16 %v222, %v220
  %v257 = vpack.c.b16 %v223, %v221
  %v258 = vpack.c.b16 %v226, %v224
  %v259 = vpack.c.b16 %v227, %v225
  %292 = vmatpush.bf16.msra.mxu0 %v242
  %293 = vmatpush.bf16.msra.mxu0 %v240
  %294 = vmatpush.bf16.msra.mxu0 %v238
  %295 = vmatpush.bf16.msra.mxu0 %v236
  %296 = vmatpush.bf16.msra.mxu0 %v234
  %297 = vmatpush.bf16.msra.mxu0 %v232
  %298 = vmatpush.bf16.msra.mxu0 %v230
  %299 = vmatpush.bf16.msra.mxu0 %v228
  %300 = vmatmul.bf16.gmra.mxu0 %v92
  %v301 = vpop.f32.mrf.mxu0
  %v302 = vadd.f32 %v128, %v301
  %v303 = vpop.f32.mrf.mxu0
  %304 = vdwg.mxu0
  %305 = vmatpush.bf16.msra.mxu0 %v258
  %306 = vmatpush.bf16.msra.mxu0 %v256
  %307 = vmatpush.bf16.msra.mxu0 %v254
  %308 = vmatpush.bf16.msra.mxu0 %v252
  %309 = vmatpush.bf16.msra.mxu0 %v250
  %310 = vmatpush.bf16.msra.mxu0 %v248
  %311 = vmatpush.bf16.msra.mxu0 %v246
  %312 = vmatpush.bf16.msra.mxu0 %v244
  %313 = vmatmul.bf16.gmra.mxu0 %v93
  %v314 = vpop.f32.mrf.mxu0
  %v315 = vadd.f32 %v302, %v314
  %v316 = vpop.f32.mrf.mxu0
  %317 = vdwg.mxu0
  %318 = vmatpush.bf16.msra.mxu0 %v243
  %319 = vmatpush.bf16.msra.mxu0 %v241
  %320 = vmatpush.bf16.msra.mxu0 %v239
  %321 = vmatpush.bf16.msra.mxu0 %v237
  %322 = vmatpush.bf16.msra.mxu0 %v235
  %323 = vmatpush.bf16.msra.mxu0 %v233
  %324 = vmatpush.bf16.msra.mxu0 %v231
  %325 = vmatpush.bf16.msra.mxu0 %v229
  %326 = vmatmul.bf16.gmra.mxu0 %v92
  %v327 = vpop.f32.mrf.mxu0
  %v328 = vadd.f32 %v129, %v327
  %v329 = vpop.f32.mrf.mxu0
  %330 = vdwg.mxu0
  %331 = vmatpush.bf16.msra.mxu0 %v259
  %332 = vmatpush.bf16.msra.mxu0 %v257
  %333 = vmatpush.bf16.msra.mxu0 %v255
  %334 = vmatpush.bf16.msra.mxu0 %v253
  %335 = vmatpush.bf16.msra.mxu0 %v251
  %336 = vmatpush.bf16.msra.mxu0 %v249
  %337 = vmatpush.bf16.msra.mxu0 %v247
  %338 = vmatpush.bf16.msra.mxu0 %v245
  %339 = vmatmul.bf16.gmra.mxu0 %v93
  %v340 = vpop.f32.mrf.mxu0
  %v341 = vadd.f32 %v328, %v340
  %v342 = vpop.f32.mrf.mxu0
  %343 = vdwg.mxu0
  %v344 = vmax.f32 %v315, 0.0
  %v345 = vmax.f32 %v341, 0.0
  %v346 = vld [vmem:[%s5] sm:$0x3]
  %v348 = vperm.slane %v346, 0
  %v349 = vperm.slane %v346, 1
  %v352 = vmul.f32 %v344, %v348
  %v353 = vmul.f32 %v345, %v349
  %v354 = vadd.f32 %v352, %v353
  %355 = vadd.xlane.f32.xlu0 %v354
  %v356 = vpop.xlane.xlu0 %355
  %v357 = vld [vmem:[#allocation2] sm:$0x1]
  %v359 = vperm.slane %v357, 0
  %v361 = vadd.f32 %v356, %v359
  %vm362 = vcmask 7168
  %363 = vst.msk [vmem:[%s7] sm:$0xff] %vm362, %v361
  // Predicated region
  $region30: #{value_network_forward.1} parent=0 // pred_check
    _
  $region31: #{value_network_forward.1} parent=0 // pred_check_branch
    %365 = sbr.rel (0) target = $region33
  $region32: #{value_network_forward.1} parent=0 // pred_region
    _
  $region33: #{value_network_forward.1} parent=0 // pred_fallthru
    _
  // Predicated region
  $region34: #{value_network_forward.1} parent=0 // pred_check
    _
  $region35: #{value_network_forward.1} parent=0 // pred_check_branch
    %367 = sbr.rel (0) target = $region37
  $region36: #{value_network_forward.1} parent=0 // pred_region
    _
  $region37: #{value_network_forward.1} parent=0 // pred_fallthru
    _

</llo_original>
